<compile_context>
chip_gen: v7x
topology: tpu7x:2x2x1
jax: 0.10.0
libtpu: 0.0.40
codegen_flags: <defaults>
</compile_context>

<pallas_src>
import functools

import jax
import jax.numpy as jnp
from jax import lax
from jax.experimental import pallas as pl
from jax.experimental.pallas import tpu as pltpu

N_EMBD = 384            # module's hard-coded embedding width
HEAD_SIZE = 64          # head_size passed to Head(head_size)
MAX_CONTEXT_LEN = 256   # module's block_size (tril buffer size)

# Sequences up to this length use the fully fused single-call kernel: the
# whole-sequence per-batch working set (x block, weights, (T,T) scores) is
# < ~3 MiB, comfortably inside even v7x's 64 MiB VMEM.  Longer sequences fall
# back to the tiled flash path.
FUSED_SEQ_LIMIT = 512

_VMEM_LIMIT = 32 * 1024 * 1024


def _pick_tile(t, candidates=(512, 256, 128)):
    """LARGEST preferred tile that divides T (descending); fall back to T."""
    for c in candidates:
        if t % c == 0:
            return c
    return t


def prepare_head_weights(wk, wq, wv):
    """One-time weight prep: fold 1/sqrt(H) into Wq and cast weights to bf16.

    Hoist this out of the per-step path (or rely on jit constant folding):
    it touches the full (C, H) weights and the kernels can never hide it.
    Returns (wq_scaled_bf16, wk_bf16, wv_bf16).
    """
    scale = jnp.asarray(wk.shape[1], wq.dtype) ** -0.5
    return ((wq * scale).astype(jnp.bfloat16),
            wk.astype(jnp.bfloat16),
            wv.astype(jnp.bfloat16))


# ------------------------ fused single-call path (T <= 512) ------------------------

def _fused_head_kernel(x_ref, wq_ref, wk_ref, wv_ref, o_ref):
    # x_ref: (1, T, C) f32 | w*_ref: (C, H) bf16 (scale folded into wq)
    # o_ref: (1, T, H)
    x = x_ref[0].astype(jnp.bfloat16)                                   # (T, C)
    q = jnp.dot(x, wq_ref[...], preferred_element_type=jnp.float32)    # (T, H)
    k = jnp.dot(x, wk_ref[...], preferred_element_type=jnp.float32)
    v = jnp.dot(x, wv_ref[...], preferred_element_type=jnp.float32)

    # s = q @ k^T via dot_general on last dims (no XLU transpose of k).
    s = lax.dot_general(q.astype(jnp.bfloat16), k.astype(jnp.bfloat16),
                        (((1,), (1,)), ((), ())),
                        preferred_element_type=jnp.float32)             # (T, T)
    t = s.shape[0]
    row = lax.broadcasted_iota(jnp.int32, (t, t), 0)
    col = lax.broadcasted_iota(jnp.int32, (t, t), 1)
    s = jnp.where(col <= row, s, jnp.float32(-jnp.inf))

    m = jnp.max(s, axis=-1, keepdims=True)         # every row has >=1 unmasked col
    p = jnp.exp(s - m)
    denom = jnp.sum(p, axis=-1, keepdims=True)
    pv = lax.dot_general(p.astype(jnp.bfloat16), v.astype(jnp.bfloat16),
                         (((1,), (0,)), ((), ())),
                         preferred_element_type=jnp.float32)            # (T, H)
    # approx reciprocal: EUP vrcp slot (documented precision trade-off).
    o_ref[0] = (pv * pl.reciprocal(denom, approx=True)).astype(o_ref.dtype)


def _fused_head(x, wq_b, wk_b, wv_b):
    B, T, C = x.shape
    H = wq_b.shape[1]
    # TODO(synk): for B == 1 on v7x, split the T axis into a leading "parallel"
    #             grid dimension so both TensorCores are used.
    return pl.pallas_call(
        _fused_head_kernel,
        out_shape=jax.ShapeDtypeStruct((B, T, H), x.dtype),
        grid_spec=pltpu.PrefetchScalarGridSpec(
            num_scalar_prefetch=0,
            grid=(B,),
            in_specs=[
                pl.BlockSpec((1, T, C), lambda b: (b, 0, 0)),
                pl.BlockSpec((C, H), lambda b: (0, 0)),   # VMEM-resident weights
                pl.BlockSpec((C, H), lambda b: (0, 0)),
                pl.BlockSpec((C, H), lambda b: (0, 0)),
            ],
            out_specs=pl.BlockSpec((1, T, H), lambda b: (b, 0, 0)),
        ),
        compiler_params=pltpu.CompilerParams(
            dimension_semantics=("parallel",),
            vmem_limit_bytes=_VMEM_LIMIT,
        ),
    )(x, wq_b, wk_b, wv_b)


# --------------------- flash path (long sequences): QKV projection ---------------------

def _qkv_proj_kernel(x_ref, wq_ref, wk_ref, wv_ref, q_ref, k_ref, v_ref):
    # x_ref: (1, tp, C) f32 | w*_ref: (C, H) bf16 | q/k/v_ref: (1, tp, H) bf16
    x = x_ref[0].astype(jnp.bfloat16)
    q_ref[0] = jnp.dot(x, wq_ref[...],
                       preferred_element_type=jnp.float32).astype(q_ref.dtype)
    k_ref[0] = jnp.dot(x, wk_ref[...],
                       preferred_element_type=jnp.float32).astype(k_ref.dtype)
    v_ref[0] = jnp.dot(x, wv_ref[...],
                       preferred_element_type=jnp.float32).astype(v_ref.dtype)


def _qkv_projection(x, wq_b, wk_b, wv_b, tile=None):
    B, T, C = x.shape
    H = wq_b.shape[1]
    tp = tile if tile is not None else _pick_tile(T)
    assert T % tp == 0
    out_sds = jax.ShapeDtypeStruct((B, T, H), jnp.bfloat16)
    out_tile = pl.BlockSpec((1, tp, H), lambda b, i: (b, i, 0))
    return pl.pallas_call(
        _qkv_proj_kernel,
        out_shape=(out_sds, out_sds, out_sds),
        grid_spec=pltpu.PrefetchScalarGridSpec(
            num_scalar_prefetch=0,
            grid=(B, T // tp),
            in_specs=[
                pl.BlockSpec((1, tp, C), lambda b, i: (b, i, 0)),
                pl.BlockSpec((C, H), lambda b, i: (0, 0)),
                pl.BlockSpec((C, H), lambda b, i: (0, 0)),
                pl.BlockSpec((C, H), lambda b, i: (0, 0)),
            ],
            out_specs=[out_tile, out_tile, out_tile],
        ),
        compiler_params=pltpu.CompilerParams(
            dimension_semantics=("parallel", "parallel"),
            vmem_limit_bytes=_VMEM_LIMIT,
        ),
    )(x, wq_b, wk_b, wv_b)


# --------------------- flash path: online-softmax causal attention ---------------------

def _attn_kernel(q_ref, k_ref, v_ref, o_ref, m_sc, l_sc, acc_sc, *, tq, tk):
    # q_ref: (1, tq, H) bf16; k_ref/v_ref: (1, tk, H) bf16; o_ref: (1, tq, H)
    # m_sc/l_sc: (tq, 1) f32; acc_sc: (tq, H) f32
    qi = pl.program_id(1)
    ki = pl.program_id(2)

    @pl.when(ki == 0)
    def _():
        m_sc[...] = jnp.full_like(m_sc, -jnp.inf)
        l_sc[...] = jnp.zeros_like(l_sc)
        acc_sc[...] = jnp.zeros_like(acc_sc)

    def make_block(masked):
        def body():
            # Scale already folded into Wq; q/k/v arrive as bf16.
            s = lax.dot_general(q_ref[0], k_ref[0], (((1,), (1,)), ((), ())),
                                preferred_element_type=jnp.float32)     # (tq, tk)
            if masked:
                row = qi * tq + lax.broadcasted_iota(jnp.int32, (tq, tk), 0)
                col = ki * tk + lax.broadcasted_iota(jnp.int32, (tq, tk), 1)
                s = jnp.where(col <= row, s, jnp.float32(-jnp.inf))

            m_prev = m_sc[...]
            m_new = jnp.maximum(m_prev, jnp.max(s, axis=-1, keepdims=True))
            alpha = jnp.exp(m_prev - m_new)            # exp(-inf)=0 on first block
            p = jnp.exp(s - m_new)                     # (tq, tk) f32
            l_sc[...] = alpha * l_sc[...] + jnp.sum(p, axis=-1, keepdims=True)
            pv = lax.dot_general(p.astype(jnp.bfloat16), v_ref[0],
                                 (((1,), (0,)), ((), ())),
                                 preferred_element_type=jnp.float32)    # (tq, H)
            acc_sc[...] = alpha * acc_sc[...] + pv
            m_sc[...] = m_new
        return body

    # ki < qi : fully visible block (no mask);  ki == qi : diagonal block (mask);
    # ki > qi : fully masked -> compute skipped here and DMA skipped via the
    #           clamped index_map below.
    pl.when(ki < qi)(make_block(masked=False))
    pl.when(ki == qi)(make_block(masked=True))

    @pl.when(ki == pl.num_programs(2) - 1)
    def _():
        inv = pl.reciprocal(l_sc[...], approx=True)    # EUP vrcp, ~free
        o_ref[0] = (acc_sc[...] * inv).astype(o_ref.dtype)


def _attention(q, k, v, out_dtype, tile=None):
    B, T, H = q.shape
    t = tile if tile is not None else _pick_tile(T)
    assert T % t == 0
    kernel = functools.partial(_attn_kernel, tq=t, tk=t)
    # Clamp the K/V block index to min(ki, qi): upper-triangle steps repeat the
    # previous block index, so Pallas skips the re-DMA entirely.
    kv_spec = pl.BlockSpec((1, t, H), lambda b, qi, ki: (b, jnp.minimum(ki, qi), 0))
    # TODO(synk): sweep pipeline_mode=pl.Buffered(3) on the K/V specs on hardware.
    return pl.pallas_call(
        kernel,
        out_shape=jax.ShapeDtypeStruct((B, T, H), out_dtype),
        grid_spec=pltpu.PrefetchScalarGridSpec(
            num_scalar_prefetch=0,
            grid=(B, T // t, T // t),
            in_specs=[
                pl.BlockSpec((1, t, H), lambda b, qi, ki: (b, qi, 0)),
                kv_spec,
                kv_spec,
            ],
            out_specs=pl.BlockSpec((1, t, H), lambda b, qi, ki: (b, qi, 0)),
            scratch_shapes=[
                pltpu.VMEM((t, 1), jnp.float32),   # running max m
                pltpu.VMEM((t, 1), jnp.float32),   # running denom l
                pltpu.VMEM((t, H), jnp.float32),   # running numerator acc
            ],
        ),
        compiler_params=pltpu.CompilerParams(
            dimension_semantics=("parallel", "parallel", "arbitrary"),
            vmem_limit_bytes=_VMEM_LIMIT,
        ),
    )(q, k, v)


def _flash_head(x, wq_b, wk_b, wv_b, tile=None):
    q, k, v = _qkv_projection(x, wq_b, wk_b, wv_b, tile=tile)
    return _attention(q, k, v, out_dtype=x.dtype, tile=tile)


# ------------------------------------ public API ------------------------------------

def head_forward_prepared(x, wq_b, wk_b, wv_b):
    """x: (B, T, C) f32; prepared bf16 weights from prepare_head_weights()."""
    T = x.shape[1]
    if T <= FUSED_SEQ_LIMIT:
        return _fused_head(x, wq_b, wk_b, wv_b)
    return _flash_head(x, wq_b, wk_b, wv_b)


def head_forward(x, wk, wq, wv):
    """Convenience wrapper matching the PyTorch module parameters.

    wk/wq/wv: (C, H) = nn.Linear weight.T.  Prefer calling prepare_head_weights
    once and head_forward_prepared per step so the scale/cast is not repeated.
    """
    return head_forward_prepared(x, *prepare_head_weights(wk, wq, wv))


def head_reference(x, wk, wq, wv):
    """Plain-JAX reference (eval-mode PyTorch forward), f32 throughout."""
    k = x @ wk
    q = x @ wq
    v = x @ wv
    s = jnp.einsum("btd,bsd->bts", q, k) * (wk.shape[1] ** -0.5)
    T = x.shape[1]
    mask = jnp.tril(jnp.ones((T, T), dtype=bool))
    s = jnp.where(mask[None], s, -jnp.inf)
    a = jax.nn.softmax(s, axis=-1)
    return jnp.einsum("bts,bsd->btd", a, v)


if __name__ == "__main__":
    key = jax.random.PRNGKey(0)
    kx, kk, kq, kv, kx2 = jax.random.split(key, 5)

    B, C, H = 2, N_EMBD, HEAD_SIZE
    init_scale = C ** -0.5
    wk = jax.random.uniform(kk, (C, H), jnp.float32, -init_scale, init_scale)
    wq = jax.random.uniform(kq, (C, H), jnp.float32, -init_scale, init_scale)
    wv = jax.random.uniform(kv, (C, H), jnp.float32, -init_scale, init_scale)
    wq_b, wk_b, wv_b = prepare_head_weights(wk, wq, wv)

    # 1) Small example (B=2, T=8, C=384, head_size=64): fused single-call path.
    T = 8
    x = jax.random.normal(kx, (B, T, C), dtype=jnp.float32)
    out = jax.block_until_ready(head_forward_prepared(x, wq_b, wk_b, wv_b))
    ref = head_reference(x, wk, wq, wv)
    assert out.shape == (B, T, H)
    # bf16 MXU operands + approx reciprocal -> small delta vs f32 reference.
    assert jnp.allclose(out, ref, atol=2e-2, rtol=2e-2), "fused mismatch (T=8)"

    # 2) Module's block_size=256: fused path, whole sequence per batch row.
    T2 = MAX_CONTEXT_LEN
    x2 = jax.random.normal(kx2, (B, T2, C), dtype=jnp.float32)
    out2 = jax.block_until_ready(head_forward_prepared(x2, wq_b, wk_b, wv_b))
    ref2 = head_reference(x2, wk, wq, wv)
    assert out2.shape == (B, T2, H)
    assert jnp.allclose(out2, ref2, atol=2e-2, rtol=2e-2), "fused mismatch (T=256)"

    # 3) Long-sequence flash path exercised at T=256 with a forced 128 tile
    #    (2x2 Q/KV block grid: masked diagonal, skipped + non-DMA'd upper blocks,
    #    bf16 three-output projection).
    out3 = jax.block_until_ready(_flash_head(x2, wq_b, wk_b, wv_b, tile=128))
    assert out3.shape == (B, T2, H)
    assert jnp.allclose(out3, ref2, atol=2e-2, rtol=2e-2), \
        "flash mismatch (T=256, tile=128)"

    print("KERNEL_OK")
</pallas_src>

<mosaic_0001>
module attributes {stable_mosaic.version = 11 : i64} {
  func.func @_fused_head_kernel(%arg0: i32, %arg1: memref<1x8x384xf32, #tpu.memory_space<vmem>>, %arg2: memref<384x64xbf16, #tpu.memory_space<vmem>>, %arg3: memref<384x64xbf16, #tpu.memory_space<vmem>>, %arg4: memref<384x64xbf16, #tpu.memory_space<vmem>>, %arg5: memref<1x8x64xf32, #tpu.memory_space<vmem>>) attributes {dimension_semantics = [#tpu.dimension_semantics<parallel>], iteration_bounds = array<i64: 2>, scalar_prefetch = 0 : i64, scratch_operands = 0 : i64, tpu.core_type = #tpu.core_type<tc>, window_params = [{transform_indices = @transform_0, window_bounds = array<i64: 1, 8, 384>}, {pipeline_mode = #tpu.pipeline_mode<synchronous>, transform_indices = @transform_1, window_bounds = array<i64: 384, 64>}, {pipeline_mode = #tpu.pipeline_mode<synchronous>, transform_indices = @transform_2, window_bounds = array<i64: 384, 64>}, {pipeline_mode = #tpu.pipeline_mode<synchronous>, transform_indices = @transform_3, window_bounds = array<i64: 384, 64>}, {transform_indices = @transform_4, window_bounds = array<i64: 1, 8, 64>}]} {
    %c0 = arith.constant 0 : index
    %c0_0 = arith.constant 0 : index
    %c0_1 = arith.constant 0 : index
    %0 = vector.load %arg1[%c0, %c0_0, %c0_1] : memref<1x8x384xf32, #tpu.memory_space<vmem>>, vector<1x8x384xf32>
    %1 = vector.shape_cast %0 : vector<1x8x384xf32> to vector<8x384xf32>
    %2 = arith.truncf %1 : vector<8x384xf32> to vector<8x384xbf16>
    %c0_2 = arith.constant 0 : index
    %c0_3 = arith.constant 0 : index
    %3 = vector.load %arg2[%c0_2, %c0_3] : memref<384x64xbf16, #tpu.memory_space<vmem>>, vector<384x64xbf16>
    %cst = arith.constant dense<0.000000e+00> : vector<8x64xf32>
    %4 = tpu.matmul %2, %3, %cst {dimension_numbers = #tpu.dot_dimension_numbers<[1], [0], [0], [1], [0, 0, 1, 1], [], []>} : vector<8x384xbf16>, vector<384x64xbf16>, vector<8x64xf32> -> vector<8x64xf32>
    %c0_4 = arith.constant 0 : index
    %c0_5 = arith.constant 0 : index
    %5 = vector.load %arg3[%c0_4, %c0_5] : memref<384x64xbf16, #tpu.memory_space<vmem>>, vector<384x64xbf16>
    %cst_6 = arith.constant dense<0.000000e+00> : vector<8x64xf32>
    %6 = tpu.matmul %2, %5, %cst_6 {dimension_numbers = #tpu.dot_dimension_numbers<[1], [0], [0], [1], [0, 0, 1, 1], [], []>} : vector<8x384xbf16>, vector<384x64xbf16>, vector<8x64xf32> -> vector<8x64xf32>
    %c0_7 = arith.constant 0 : index
    %c0_8 = arith.constant 0 : index
    %7 = vector.load %arg4[%c0_7, %c0_8] : memref<384x64xbf16, #tpu.memory_space<vmem>>, vector<384x64xbf16>
    %cst_9 = arith.constant dense<0.000000e+00> : vector<8x64xf32>
    %8 = tpu.matmul %2, %7, %cst_9 {dimension_numbers = #tpu.dot_dimension_numbers<[1], [0], [0], [1], [0, 0, 1, 1], [], []>} : vector<8x384xbf16>, vector<384x64xbf16>, vector<8x64xf32> -> vector<8x64xf32>
    %9 = arith.truncf %4 : vector<8x64xf32> to vector<8x64xbf16>
    %10 = arith.truncf %6 : vector<8x64xf32> to vector<8x64xbf16>
    %cst_10 = arith.constant dense<0.000000e+00> : vector<8x8xf32>
    %11 = tpu.matmul %9, %10, %cst_10 {dimension_numbers = #tpu.dot_dimension_numbers<[1], [1], [0], [0], [0, 0, 1, 0], [], []>} : vector<8x64xbf16>, vector<8x64xbf16>, vector<8x8xf32> -> vector<8x8xf32>
    %12 = tpu.iota {dimensions = array<i32: 0>} : vector<8x8xi32>
    %13 = tpu.iota {dimensions = array<i32: 1>} : vector<8x8xi32>
    %14 = arith.cmpi sle, %13, %12 : vector<8x8xi32>
    %cst_11 = arith.constant 0xFF800000 : f32
    %15 = vector.broadcast %cst_11 : f32 to vector<8x8xf32>
    %16 = arith.select %14, %11, %15 : vector<8x8xi1>, vector<8x8xf32>
    %cst_12 = arith.constant dense<0xFF800000> : vector<8xf32>
    %17 = vector.multi_reduction <maximumf>, %16, %cst_12 [1] : vector<8x8xf32> to vector<8xf32>
    %18 = vector.shape_cast %17 : vector<8xf32> to vector<8x1xf32>
    %19 = vector.broadcast %18 : vector<8x1xf32> to vector<8x8xf32>
    %20 = arith.subf %16, %19 : vector<8x8xf32>
    %21 = math.exp %20 : vector<8x8xf32>
    %cst_13 = arith.constant dense<0.000000e+00> : vector<8xf32>
    %22 = vector.multi_reduction <add>, %21, %cst_13 [1] : vector<8x8xf32> to vector<8xf32>
    %23 = vector.shape_cast %22 : vector<8xf32> to vector<8x1xf32>
    %24 = arith.truncf %21 : vector<8x8xf32> to vector<8x8xbf16>
    %25 = arith.truncf %8 : vector<8x64xf32> to vector<8x64xbf16>
    %cst_14 = arith.constant dense<0.000000e+00> : vector<8x64xf32>
    %26 = tpu.matmul %24, %25, %cst_14 {dimension_numbers = #tpu.dot_dimension_numbers<[1], [0], [0], [1], [0, 0, 1, 1], [], []>} : vector<8x8xbf16>, vector<8x64xbf16>, vector<8x64xf32> -> vector<8x64xf32>
    %27 = tpu.reciprocal %23 {approx = true} : vector<8x1xf32> -> vector<8x1xf32>
    %28 = vector.broadcast %27 : vector<8x1xf32> to vector<8x64xf32>
    %29 = arith.mulf %26, %28 : vector<8x64xf32>
    %c0_15 = arith.constant 0 : index
    %c0_16 = arith.constant 0 : index
    %c0_17 = arith.constant 0 : index
    %30 = vector.load %arg5[%c0_15, %c0_16, %c0_17] : memref<1x8x64xf32, #tpu.memory_space<vmem>>, vector<1x8x64xf32>
    %31 = vector.shape_cast %30 : vector<1x8x64xf32> to vector<8x64xf32>
    %32 = vector.shape_cast %29 : vector<8x64xf32> to vector<1x8x64xf32>
    tpu.vector_store %arg5[%c0_15, %c0_16, %c0_17], %32 {strides = array<i32>} : memref<1x8x64xf32, #tpu.memory_space<vmem>>, vector<1x8x64xf32>,
    return
  }
  func.func @transform_0(%arg0: i32) -> (i32, i32, i32) {
    %c0_i32 = arith.constant 0 : i32
    %c0_i32_0 = arith.constant 0 : i32
    %c0_i32_1 = arith.constant 0 : i32
    return %arg0, %c0_i32, %c0_i32_0 : i32, i32, i32
  }
  func.func @transform_1(%arg0: i32) -> (i32, i32) {
    %c0_i32 = arith.constant 0 : i32
    %c0_i32_0 = arith.constant 0 : i32
    %c0_i32_1 = arith.constant 0 : i32
    return %c0_i32, %c0_i32_0 : i32, i32
  }
  func.func @transform_2(%arg0: i32) -> (i32, i32) {
    %c0_i32 = arith.constant 0 : i32
    %c0_i32_0 = arith.constant 0 : i32
    %c0_i32_1 = arith.constant 0 : i32
    return %c0_i32, %c0_i32_0 : i32, i32
  }
  func.func @transform_3(%arg0: i32) -> (i32, i32) {
    %c0_i32 = arith.constant 0 : i32
    %c0_i32_0 = arith.constant 0 : i32
    %c0_i32_1 = arith.constant 0 : i32
    return %c0_i32, %c0_i32_0 : i32, i32
  }
  func.func @transform_4(%arg0: i32) -> (i32, i32, i32) {
    %c0_i32 = arith.constant 0 : i32
    %c0_i32_0 = arith.constant 0 : i32
    %c0_i32_1 = arith.constant 0 : i32
    return %arg0, %c0_i32, %c0_i32_0 : i32, i32, i32
  }
}

</mosaic_0001>

<llo_original>
// kernel: tpu_custom_call.1
$region0: #{tpu_custom_call.1}
  #allocation0 [shape = 'u32[]', space=smem, size = 0x4, offset = 0x4, fixed_abs, tag = 'smem constant byte address 0x4 - core index']
  #allocation1 [shape = 'u32[144,128]{1,0:T(1,128)}', space=vmem, size = 0x12000, scoped, tag = 'internal scratch']
  %s0 = inlined_call_operand.vmem [shape: f32[2,8,384], index: 0, kind: input, shape index: {}]
  %s1 = inlined_call_operand.vmem [shape: bf16[384,64], index: 1, kind: input, shape index: {}]
  %s2 = inlined_call_operand.vmem [shape: bf16[384,64], index: 2, kind: input, shape index: {}]
  %s3 = inlined_call_operand.vmem [shape: bf16[384,64], index: 3, kind: input, shape index: {}]
  %s4 = inlined_call_operand.hbm [shape: f32[2,8,64], index: 4, kind: output, shape index: {}]
  %s5 = sld [smem:[#allocation0]]
  $region49: #{tpu_custom_call.1} parent=0
    _
  %s7 = ssub.s32 1, %s5
  %s8 = scalar_select 0, %s7, %s5
  $region1: #{tpu_custom_call.1} parent=0
    #allocation2 [shape = 'u8[8192]{0}', space=vmem, size = 0x2000, scoped, tag = 'output window, operand 0']
    #allocation3 [shape = 's32[2]{0}', space=sflag, size = 0x8, scoped, tag = 'scoped memory for tpu_custom_call.1']
    %9 = vsyncpa [#allocation3], 0
    %s10 = scalar_lea.sflag [#allocation3], 1
    %11 = vsyncpa %s10, 0
    loop: start=0, step=1, limit=4
    $region2: #{tpu_custom_call.1} parent=1 // loop_pre_header
      _
    $region3: #{tpu_custom_call.1} parent=1 // loop_header
      %s13 = sphi 0, %s17
      %p14 = scmp.ge.s32.totalorder %s13, 4
      %s23 = sphi 0, %s25
      %s26 = sphi 0, %s23
      %s27 = sphi 0, %s26
      %s43 = sphi 0, %s27
      %s47 = sphi 0, %s47
      %s49 = sphi 0, %s47
      %s50 = sphi 0, %s49
      %s64 = sphi 0, %s50
      %s68 = sphi 0, %s68
      %s70 = sphi 0, %s68
      %s71 = sphi 0, %s70
      %s85 = sphi 0, %s71
      %s89 = sphi 0, %s89
      %s91 = sphi 0, %s89
      %s92 = sphi 0, %s91
      %s106 = sphi 0, %s92
      %s112 = sphi 0, %s114
      %s115 = sphi 0, %s112
      %s116 = sphi 0, %s115
      %s132 = sphi 0, %s116
    $region4: #{tpu_custom_call.1} parent=1 // loop_header_branch
      %16 = sbr.rel (%p14) target = $region8
    $region5: #{tpu_custom_call.1} parent=1 // loop_body
      %s18 = ssub.s32 %s13, 1
      %s19 = ssub.s32 %s13, 2
      %s20 = sadd.s32 %s13, 1
      %s21 = ssub.s32 %s13, %s20
      %p22 = scmp.eq.s32.totalorder %s21, 0
      %s24 = sadd.s32 %s23, 1
      %s25 = scalar_select %p22, %s23, %s24
      %p28 = pneg %p22
      %p29 = scmp.eq.s32.totalorder %s13, 1
      %p30 = por %p28, %p29
      %p31 = scmp.ne.s32.totalorder %s23, %s26
      %p32 = scmp.eq.s32.totalorder %s13, 0
      %p33 = por %p31, %p32
      %p34 = scmp.ne.s32.totalorder %s23, %s26
      %p35 = scmp.eq.s32.totalorder %s18, 1
      %p36 = por %p34, %p35
      %p37 = scmp.ne.s32.totalorder %s26, %s27
      %p38 = scmp.eq.s32.totalorder %s18, 0
      %p39 = por %p37, %p38
      %p40 = scmp.ne.s32.totalorder %s26, %s27
      %p41 = scmp.eq.s32.totalorder %s19, 1
      %p42 = por %p40, %p41
      %p44 = scmp.ne.s32.totalorder %s27, %s43
      %p45 = scmp.eq.s32.totalorder %s19, 0
      %p46 = por %p44, %p45
      %s48 = sadd.s32 %s47, 1
      %p51 = scmp.eq.s32.totalorder %s13, 1
      %p52 = scmp.ne.s32.totalorder %s47, %s49
      %p53 = scmp.eq.s32.totalorder %s13, 0
      %p54 = por %p52, %p53
      %p55 = scmp.ne.s32.totalorder %s47, %s49
      %p56 = scmp.eq.s32.totalorder %s18, 1
      %p57 = por %p55, %p56
      %p58 = scmp.ne.s32.totalorder %s49, %s50
      %p59 = scmp.eq.s32.totalorder %s18, 0
      %p60 = por %p58, %p59
      %p61 = scmp.ne.s32.totalorder %s49, %s50
      %p62 = scmp.eq.s32.totalorder %s19, 1
      %p63 = por %p61, %p62
      %p65 = scmp.ne.s32.totalorder %s50, %s64
      %p66 = scmp.eq.s32.totalorder %s19, 0
      %p67 = por %p65, %p66
      %s69 = sadd.s32 %s68, 1
      %p72 = scmp.eq.s32.totalorder %s13, 1
      %p73 = scmp.ne.s32.totalorder %s68, %s70
      %p74 = scmp.eq.s32.totalorder %s13, 0
      %p75 = por %p73, %p74
      %p76 = scmp.ne.s32.totalorder %s68, %s70
      %p77 = scmp.eq.s32.totalorder %s18, 1
      %p78 = por %p76, %p77
      %p79 = scmp.ne.s32.totalorder %s70, %s71
      %p80 = scmp.eq.s32.totalorder %s18, 0
      %p81 = por %p79, %p80
      %p82 = scmp.ne.s32.totalorder %s70, %s71
      %p83 = scmp.eq.s32.totalorder %s19, 1
      %p84 = por %p82, %p83
      %p86 = scmp.ne.s32.totalorder %s71, %s85
      %p87 = scmp.eq.s32.totalorder %s19, 0
      %p88 = por %p86, %p87
      %s90 = sadd.s32 %s89, 1
      %p93 = scmp.eq.s32.totalorder %s13, 1
      %p94 = scmp.ne.s32.totalorder %s89, %s91
      %p95 = scmp.eq.s32.totalorder %s13, 0
      %p96 = por %p94, %p95
      %p97 = scmp.ne.s32.totalorder %s89, %s91
      %p98 = scmp.eq.s32.totalorder %s18, 1
      %p99 = por %p97, %p98
      %p100 = scmp.ne.s32.totalorder %s91, %s92
      %p101 = scmp.eq.s32.totalorder %s18, 0
      %p102 = por %p100, %p101
      %p103 = scmp.ne.s32.totalorder %s91, %s92
      %p104 = scmp.eq.s32.totalorder %s19, 1
      %p105 = por %p103, %p104
      %p107 = scmp.ne.s32.totalorder %s92, %s106
      %p108 = scmp.eq.s32.totalorder %s19, 0
      %p109 = por %p107, %p108
      %s110 = ssub.s32 %s13, %s20
      %p111 = scmp.eq.s32.totalorder %s110, 0
      %s113 = sadd.s32 %s112, 1
      %s114 = scalar_select %p111, %s112, %s113
      %p117 = pneg %p111
      %p118 = scmp.eq.s32.totalorder %s13, 1
      %p119 = por %p117, %p118
      %p120 = scmp.ne.s32.totalorder %s112, %s115
      %p121 = scmp.eq.s32.totalorder %s13, 0
      %p122 = por %p120, %p121
      %p123 = scmp.ne.s32.totalorder %s112, %s115
      %p124 = scmp.eq.s32.totalorder %s18, 1
      %p125 = por %p123, %p124
      %p126 = scmp.ne.s32.totalorder %s115, %s116
      %p127 = scmp.eq.s32.totalorder %s18, 0
      %p128 = por %p126, %p127
      %p129 = scmp.ne.s32.totalorder %s115, %s116
      %p130 = scmp.eq.s32.totalorder %s19, 1
      %p131 = por %p129, %p130
      %p133 = scmp.ne.s32.totalorder %s116, %s132
      %p134 = scmp.eq.s32.totalorder %s19, 0
      %p135 = por %p133, %p134
      %p136 = scmp.le.s32.totalorder 1, %s13
      %p137 = scmp.lt.s32.totalorder %s13, 3
      %p138 = pnand %p136, %p137
      %p139 = pneg %p138
      // Predicated region
      $region9: #{tpu_custom_call.1} parent=5 // pred_check
        _
      $region10: #{tpu_custom_call.1} parent=5 // pred_check_branch
        %141 = sbr.rel (%p138) target = $region12
      $region11: #{tpu_custom_call.1} parent=5 // pred_region
        %s142 = ssub.s32 %s13, 1
        // Predicated region
        $region13: #{tpu_custom_call.1} parent=11 // pred_check
          %p143 = pneg %p60
        $region14: #{tpu_custom_call.1} parent=11 // pred_check_branch
          %145 = sbr.rel (%p143) target = $region16
        $region15: #{tpu_custom_call.1} parent=11 // pred_region
          _
        $region16: #{tpu_custom_call.1} parent=11 // pred_fallthru
          _
        // Predicated region
        $region17: #{tpu_custom_call.1} parent=11 // pred_check
          %p146 = pneg %p81
        $region18: #{tpu_custom_call.1} parent=11 // pred_check_branch
          %148 = sbr.rel (%p146) target = $region20
        $region19: #{tpu_custom_call.1} parent=11 // pred_region
          _
        $region20: #{tpu_custom_call.1} parent=11 // pred_fallthru
          _
        // Predicated region
        $region21: #{tpu_custom_call.1} parent=11 // pred_check
          %p149 = pneg %p102
        $region22: #{tpu_custom_call.1} parent=11 // pred_check_branch
          %151 = sbr.rel (%p149) target = $region24
        $region23: #{tpu_custom_call.1} parent=11 // pred_region
          _
        $region24: #{tpu_custom_call.1} parent=11 // pred_fallthru
          _
      $region12: #{tpu_custom_call.1} parent=5 // pred_fallthru
        _
      %p152 = scmp.lt.s32.totalorder %s13, 2
      // Predicated region
      $region25: #{tpu_custom_call.1} parent=5 // pred_check
        %p153 = pneg %p152
      $region26: #{tpu_custom_call.1} parent=5 // pred_check_branch
        %155 = sbr.rel (%p153) target = $region28
      $region27: #{tpu_custom_call.1} parent=5 // pred_region
        // Predicated region
        $region29: #{tpu_custom_call.1} parent=27 // pred_check
          %p156 = pneg %p33
        $region30: #{tpu_custom_call.1} parent=27 // pred_check_branch
          %158 = sbr.rel (%p156) target = $region32
        $region31: #{tpu_custom_call.1} parent=27 // pred_region
          %p159 = scmp.lt.s32.totalorder %s13, 1
          %s160 = scalar_select %p159, %s13, 1
          %s161 = smul.addr %s160, 3
          %s162 = smul.addr %s161, 8
          %s163 = scalar_lea.vmem %s0, %s162
        $region32: #{tpu_custom_call.1} parent=27 // pred_fallthru
          _
      $region28: #{tpu_custom_call.1} parent=5 // pred_fallthru
        _
      %p164 = scmp.le.s32.totalorder 1, %s13
      %p165 = scmp.lt.s32.totalorder %s13, 3
      %p166 = pnand %p164, %p165
      %p167 = pneg %p166
      // Predicated region
      $region33: #{tpu_custom_call.1} parent=5 // pred_check
        _
      $region34: #{tpu_custom_call.1} parent=5 // pred_check_branch
        %169 = sbr.rel (%p166) target = $region36
      $region35: #{tpu_custom_call.1} parent=5 // pred_region
        %s170 = ssub.s32 %s13, 1
        %p171 = scmp.lt.s32.totalorder %s18, 1
        %s172 = scalar_select %p171, %s18, 1
        %s173 = smul.addr %s172, 3
        %s174 = smul.addr %s173, 8
        %s175 = scalar_lea.vmem %s0, %s174
        %p176 = pneg %p39
        %p177 = pneg %p36
        %p178 = pneg %p60
        %p179 = pneg %p57
        %p180 = pneg %p81
        %p181 = pneg %p78
        %p182 = pneg %p102
        %p183 = pneg %p99
        %p184 = pneg %p128
        %p185 = pneg %p125
        %s186 = sand.u32 %s115, 1
        %s187 = scalar_lea.sflag [#allocation3], %s186
        %s188 = sand.u32 %s115, 1
        %s189 = smul.addr %s188, 8
        %s190 = scalar_lea.vmem [#allocation2], %s189
        %p191 = scmp.lt.s32.totalorder %s18, 1
        %s192 = scalar_select %p191, %s18, 1
        %s193 = smul.addr %s192, 3
        %s194 = smul.addr %s193, 8
        %s195 = scalar_lea.vmem %s0, %s194
        %v197 = vld [vmem:[%s195] sm:$0xff]
        %v198 = vld [vmem:[%s195 + $0x8] sm:$0xff]
        %v199 = vld [vmem:[%s195 + $0x10] sm:$0xff]
        %v200 = vpack.c.bf16 %v197, %v197
        %v201 = vpack.c.bf16 %v198, %v198
        %v202 = vpack.c.bf16 %v199, %v199
        %v203 = vld [vmem:[%s1] sm:$0xf]
        %v204 = vld [vmem:[%s1 + $0x4] sm:$0xf]
        %v205 = vld [vmem:[%s1 + $0x8] sm:$0xf]
        %v206 = vld [vmem:[%s1 + $0xc] sm:$0xf]
        %v207 = vld [vmem:[%s1 + $0x10] sm:$0xf]
        %v208 = vld [vmem:[%s1 + $0x14] sm:$0xf]
        %v209 = vld [vmem:[%s1 + $0x18] sm:$0xf]
        %v210 = vld [vmem:[%s1 + $0x1c] sm:$0xf]
        %v211 = vld [vmem:[%s1 + $0x20] sm:$0xf]
        %v212 = vld [vmem:[%s1 + $0x24] sm:$0xf]
        %v213 = vld [vmem:[%s1 + $0x28] sm:$0xf]
        %v214 = vld [vmem:[%s1 + $0x2c] sm:$0xf]
        %v215 = vld [vmem:[%s1 + $0x30] sm:$0xf]
        %v216 = vld [vmem:[%s1 + $0x34] sm:$0xf]
        %v217 = vld [vmem:[%s1 + $0x38] sm:$0xf]
        %v218 = vld [vmem:[%s1 + $0x3c] sm:$0xf]
        %v219 = vld [vmem:[%s1 + $0x40] sm:$0xf]
        %v220 = vld [vmem:[%s1 + $0x44] sm:$0xf]
        %v221 = vld [vmem:[%s1 + $0x48] sm:$0xf]
        %v222 = vld [vmem:[%s1 + $0x4c] sm:$0xf]
        %v223 = vld [vmem:[%s1 + $0x50] sm:$0xf]
        %v224 = vld [vmem:[%s1 + $0x54] sm:$0xf]
        %v225 = vld [vmem:[%s1 + $0x58] sm:$0xf]
        %v226 = vld [vmem:[%s1 + $0x5c] sm:$0xf]
        %v227 = vld [vmem:[%s1 + $0x60] sm:$0xf]
        %v228 = vld [vmem:[%s1 + $0x64] sm:$0xf]
        %v229 = vld [vmem:[%s1 + $0x68] sm:$0xf]
        %v230 = vld [vmem:[%s1 + $0x6c] sm:$0xf]
        %v231 = vld [vmem:[%s1 + $0x70] sm:$0xf]
        %v232 = vld [vmem:[%s1 + $0x74] sm:$0xf]
        %v233 = vld [vmem:[%s1 + $0x78] sm:$0xf]
        %v234 = vld [vmem:[%s1 + $0x7c] sm:$0xf]
        %v235 = vld [vmem:[%s1 + $0x80] sm:$0xf]
        %v236 = vld [vmem:[%s1 + $0x84] sm:$0xf]
        %v237 = vld [vmem:[%s1 + $0x88] sm:$0xf]
        %v238 = vld [vmem:[%s1 + $0x8c] sm:$0xf]
        %v239 = vld [vmem:[%s1 + $0x90] sm:$0xf]
        %v240 = vld [vmem:[%s1 + $0x94] sm:$0xf]
        %v241 = vld [vmem:[%s1 + $0x98] sm:$0xf]
        %v242 = vld [vmem:[%s1 + $0x9c] sm:$0xf]
        %v243 = vld [vmem:[%s1 + $0xa0] sm:$0xf]
        %v244 = vld [vmem:[%s1 + $0xa4] sm:$0xf]
        %v245 = vld [vmem:[%s1 + $0xa8] sm:$0xf]
        %v246 = vld [vmem:[%s1 + $0xac] sm:$0xf]
        %v247 = vld [vmem:[%s1 + $0xb0] sm:$0xf]
        %v248 = vld [vmem:[%s1 + $0xb4] sm:$0xf]
        %v249 = vld [vmem:[%s1 + $0xb8] sm:$0xf]
        %v250 = vld [vmem:[%s1 + $0xbc] sm:$0xf]
        %v299 = vunpack.c.l.b16 %v203
        %v300 = vunpack.c.l.b16 %v204
        %v301 = vunpack.c.l.b16 %v205
        %v302 = vunpack.c.l.b16 %v206
        %v303 = vunpack.c.l.b16 %v207
        %v304 = vunpack.c.l.b16 %v208
        %v305 = vunpack.c.l.b16 %v209
        %v306 = vunpack.c.l.b16 %v210
        %v307 = vunpack.c.l.b16 %v211
        %v308 = vunpack.c.l.b16 %v212
        %v309 = vunpack.c.l.b16 %v213
        %v310 = vunpack.c.l.b16 %v214
        %v311 = vunpack.c.l.b16 %v215
        %v312 = vunpack.c.l.b16 %v216
        %v313 = vunpack.c.l.b16 %v217
        %v314 = vunpack.c.l.b16 %v218
        %v315 = vunpack.c.l.b16 %v219
        %v316 = vunpack.c.l.b16 %v220
        %v317 = vunpack.c.l.b16 %v221
        %v318 = vunpack.c.l.b16 %v222
        %v319 = vunpack.c.l.b16 %v223
        %v320 = vunpack.c.l.b16 %v224
        %v321 = vunpack.c.l.b16 %v225
        %v322 = vunpack.c.l.b16 %v226
        %v323 = vunpack.c.l.b16 %v227
        %v324 = vunpack.c.l.b16 %v228
        %v325 = vunpack.c.l.b16 %v229
        %v326 = vunpack.c.l.b16 %v230
        %v327 = vunpack.c.l.b16 %v231
        %v328 = vunpack.c.l.b16 %v232
        %v329 = vunpack.c.l.b16 %v233
        %v330 = vunpack.c.l.b16 %v234
        %v331 = vunpack.c.l.b16 %v235
        %v332 = vunpack.c.l.b16 %v236
        %v333 = vunpack.c.l.b16 %v237
        %v334 = vunpack.c.l.b16 %v238
        %v335 = vunpack.c.l.b16 %v239
        %v336 = vunpack.c.l.b16 %v240
        %v337 = vunpack.c.l.b16 %v241
        %v338 = vunpack.c.l.b16 %v242
        %v339 = vunpack.c.l.b16 %v243
        %v340 = vunpack.c.l.b16 %v244
        %v341 = vunpack.c.l.b16 %v245
        %v342 = vunpack.c.l.b16 %v246
        %v343 = vunpack.c.l.b16 %v247
        %v344 = vunpack.c.l.b16 %v248
        %v345 = vunpack.c.l.b16 %v249
        %v346 = vunpack.c.l.b16 %v250
        %v347 = vpack.c.b16 %v300, %v299
        %v348 = vpack.c.b16 %v302, %v301
        %v349 = vpack.c.b16 %v304, %v303
        %v350 = vpack.c.b16 %v306, %v305
        %v351 = vpack.c.b16 %v308, %v307
        %v352 = vpack.c.b16 %v310, %v309
        %v353 = vpack.c.b16 %v312, %v311
        %v354 = vpack.c.b16 %v314, %v313
        %v355 = vpack.c.b16 %v316, %v315
        %v356 = vpack.c.b16 %v318, %v317
        %v357 = vpack.c.b16 %v320, %v319
        %v358 = vpack.c.b16 %v322, %v321
        %v359 = vpack.c.b16 %v324, %v323
        %v360 = vpack.c.b16 %v326, %v325
        %v361 = vpack.c.b16 %v328, %v327
        %v362 = vpack.c.b16 %v330, %v329
        %v363 = vpack.c.b16 %v332, %v331
        %v364 = vpack.c.b16 %v334, %v333
        %v365 = vpack.c.b16 %v336, %v335
        %v366 = vpack.c.b16 %v338, %v337
        %v367 = vpack.c.b16 %v340, %v339
        %v368 = vpack.c.b16 %v342, %v341
        %v369 = vpack.c.b16 %v344, %v343
        %v370 = vpack.c.b16 %v346, %v345
        %395 = vmatprep.subr.bf16.mxu0 0
        %396 = vmatpush1.bf16.msra.mxu0 %v347
        %397 = vmatprep.subr.bf16.mxu0 0
        %398 = vmatpush1.bf16.msra.mxu0 %v348
        %399 = vmatprep.subr.bf16.mxu0 0
        %400 = vmatpush1.bf16.msra.mxu0 %v349
        %401 = vmatprep.subr.bf16.mxu0 0
        %402 = vmatpush1.bf16.msra.mxu0 %v350
        %403 = vmatprep.subr.bf16.mxu0 0
        %404 = vmatpush1.bf16.msra.mxu0 %v351
        %405 = vmatprep.subr.bf16.mxu0 0
        %406 = vmatpush1.bf16.msra.mxu0 %v352
        %407 = vmatprep.subr.bf16.mxu0 0
        %408 = vmatpush1.bf16.msra.mxu0 %v353
        %409 = vmatprep.subr.bf16.mxu0 0
        %410 = vmatpush1.bf16.msra.mxu0 %v354
        %411 = vmatprep.subr.bf16.mxu0 0
        %412 = vmatpush1.bf16.msra.mxu0 %v355
        %413 = vmatprep.subr.bf16.mxu0 0
        %414 = vmatpush1.bf16.msra.mxu0 %v356
        %415 = vmatprep.subr.bf16.mxu0 0
        %416 = vmatpush1.bf16.msra.mxu0 %v357
        %417 = vmatprep.subr.bf16.mxu0 0
        %418 = vmatpush1.bf16.msra.mxu0 %v358
        %419 = vmatprep.subr.bf16.mxu0 0
        %420 = vmatpush1.bf16.msra.mxu0 %v359
        %421 = vmatprep.subr.bf16.mxu0 0
        %422 = vmatpush1.bf16.msra.mxu0 %v360
        %423 = vmatprep.subr.bf16.mxu0 0
        %424 = vmatpush1.bf16.msra.mxu0 %v361
        %425 = vmatprep.subr.bf16.mxu0 0
        %426 = vmatpush1.bf16.msra.mxu0 %v362
        %427 = vmatprep.mubr.bf16.mxu0 %v201
        %428 = vmatmul.mubr.bf16.gmra.mrb[0].mxu0 %v200
        %v429 = vpop.f32.mrb[0].mxu0
        %v430 = vadd.f32 0.0, %v429
        %v431 = vpop.f32.mrb[0].mxu0
        %v432 = vpop.f32.mrb[0].mxu0
        %v433 = vpop.f32.mrb[0].mxu0
        %434 = vdwg.mxu0
        %435 = vmatprep.subr.bf16.mxu0 0
        %436 = vmatpush1.bf16.msra.mxu0 %v363
        %437 = vmatprep.subr.bf16.mxu0 0
        %438 = vmatpush1.bf16.msra.mxu0 %v364
        %439 = vmatprep.subr.bf16.mxu0 0
        %440 = vmatpush1.bf16.msra.mxu0 %v365
        %441 = vmatprep.subr.bf16.mxu0 0
        %442 = vmatpush1.bf16.msra.mxu0 %v366
        %443 = vmatprep.subr.bf16.mxu0 0
        %444 = vmatpush1.bf16.msra.mxu0 %v367
        %445 = vmatprep.subr.bf16.mxu0 0
        %446 = vmatpush1.bf16.msra.mxu0 %v368
        %447 = vmatprep.subr.bf16.mxu0 0
        %448 = vmatpush1.bf16.msra.mxu0 %v369
        %449 = vmatprep.subr.bf16.mxu0 0
        %450 = vmatpush1.bf16.msra.mxu0 %v370
        %451 = vmatprep.subr.bf16.mxu0 0
        %452 = vmatpush1.bf16.msra.mxu0 0
        %453 = vmatprep.subr.bf16.mxu0 0
        %454 = vmatpush1.bf16.msra.mxu0 0
        %455 = vmatprep.subr.bf16.mxu0 0
        %456 = vmatpush1.bf16.msra.mxu0 0
        %457 = vmatprep.subr.bf16.mxu0 0
        %458 = vmatpush1.bf16.msra.mxu0 0
        %459 = vmatprep.subr.bf16.mxu0 0
        %460 = vmatpush1.bf16.msra.mxu0 0
        %461 = vmatprep.subr.bf16.mxu0 0
        %462 = vmatpush1.bf16.msra.mxu0 0
        %463 = vmatprep.subr.bf16.mxu0 0
        %464 = vmatpush1.bf16.msra.mxu0 0
        %465 = vmatprep.subr.bf16.mxu0 0
        %466 = vmatpush1.bf16.msra.mxu0 0
        %467 = vmatprep.mubr.bf16.mxu0 0
        %468 = vmatmul.mubr.bf16.gmra.mrb[0].mxu0 %v202
        %v469 = vpop.f32.mrb[0].mxu0
        %v470 = vadd.f32 %v430, %v469
        %v471 = vpop.f32.mrb[0].mxu0
        %v472 = vpop.f32.mrb[0].mxu0
        %v473 = vpop.f32.mrb[0].mxu0
        %474 = vdwg.mxu0
        %v475 = vld [vmem:[%s2] sm:$0xf]
        %v476 = vld [vmem:[%s2 + $0x4] sm:$0xf]
        %v477 = vld [vmem:[%s2 + $0x8] sm:$0xf]
        %v478 = vld [vmem:[%s2 + $0xc] sm:$0xf]
        %v479 = vld [vmem:[%s2 + $0x10] sm:$0xf]
        %v480 = vld [vmem:[%s2 + $0x14] sm:$0xf]
        %v481 = vld [vmem:[%s2 + $0x18] sm:$0xf]
        %v482 = vld [vmem:[%s2 + $0x1c] sm:$0xf]
        %v483 = vld [vmem:[%s2 + $0x20] sm:$0xf]
        %v484 = vld [vmem:[%s2 + $0x24] sm:$0xf]
        %v485 = vld [vmem:[%s2 + $0x28] sm:$0xf]
        %v486 = vld [vmem:[%s2 + $0x2c] sm:$0xf]
        %v487 = vld [vmem:[%s2 + $0x30] sm:$0xf]
        %v488 = vld [vmem:[%s2 + $0x34] sm:$0xf]
        %v489 = vld [vmem:[%s2 + $0x38] sm:$0xf]
        %v490 = vld [vmem:[%s2 + $0x3c] sm:$0xf]
        %v491 = vld [vmem:[%s2 + $0x40] sm:$0xf]
        %v492 = vld [vmem:[%s2 + $0x44] sm:$0xf]
        %v493 = vld [vmem:[%s2 + $0x48] sm:$0xf]
        %v494 = vld [vmem:[%s2 + $0x4c] sm:$0xf]
        %v495 = vld [vmem:[%s2 + $0x50] sm:$0xf]
        %v496 = vld [vmem:[%s2 + $0x54] sm:$0xf]
        %v497 = vld [vmem:[%s2 + $0x58] sm:$0xf]
        %v498 = vld [vmem:[%s2 + $0x5c] sm:$0xf]
        %v499 = vld [vmem:[%s2 + $0x60] sm:$0xf]
        %v500 = vld [vmem:[%s2 + $0x64] sm:$0xf]
        %v501 = vld [vmem:[%s2 + $0x68] sm:$0xf]
        %v502 = vld [vmem:[%s2 + $0x6c] sm:$0xf]
        %v503 = vld [vmem:[%s2 + $0x70] sm:$0xf]
        %v504 = vld [vmem:[%s2 + $0x74] sm:$0xf]
        %v505 = vld [vmem:[%s2 + $0x78] sm:$0xf]
        %v506 = vld [vmem:[%s2 + $0x7c] sm:$0xf]
        %v507 = vld [vmem:[%s2 + $0x80] sm:$0xf]
        %v508 = vld [vmem:[%s2 + $0x84] sm:$0xf]
        %v509 = vld [vmem:[%s2 + $0x88] sm:$0xf]
        %v510 = vld [vmem:[%s2 + $0x8c] sm:$0xf]
        %v511 = vld [vmem:[%s2 + $0x90] sm:$0xf]
        %v512 = vld [vmem:[%s2 + $0x94] sm:$0xf]
        %v513 = vld [vmem:[%s2 + $0x98] sm:$0xf]
        %v514 = vld [vmem:[%s2 + $0x9c] sm:$0xf]
        %v515 = vld [vmem:[%s2 + $0xa0] sm:$0xf]
        %v516 = vld [vmem:[%s2 + $0xa4] sm:$0xf]
        %v517 = vld [vmem:[%s2 + $0xa8] sm:$0xf]
        %v518 = vld [vmem:[%s2 + $0xac] sm:$0xf]
        %v519 = vld [vmem:[%s2 + $0xb0] sm:$0xf]
        %v520 = vld [vmem:[%s2 + $0xb4] sm:$0xf]
        %v521 = vld [vmem:[%s2 + $0xb8] sm:$0xf]
        %v522 = vld [vmem:[%s2 + $0xbc] sm:$0xf]
        %v571 = vunpack.c.l.b16 %v475
        %v572 = vunpack.c.l.b16 %v476
        %v573 = vunpack.c.l.b16 %v477
        %v574 = vunpack.c.l.b16 %v478
        %v575 = vunpack.c.l.b16 %v479
        %v576 = vunpack.c.l.b16 %v480
        %v577 = vunpack.c.l.b16 %v481
        %v578 = vunpack.c.l.b16 %v482
        %v579 = vunpack.c.l.b16 %v483
        %v580 = vunpack.c.l.b16 %v484
        %v581 = vunpack.c.l.b16 %v485
        %v582 = vunpack.c.l.b16 %v486
        %v583 = vunpack.c.l.b16 %v487
        %v584 = vunpack.c.l.b16 %v488
        %v585 = vunpack.c.l.b16 %v489
        %v586 = vunpack.c.l.b16 %v490
        %v587 = vunpack.c.l.b16 %v491
        %v588 = vunpack.c.l.b16 %v492
        %v589 = vunpack.c.l.b16 %v493
        %v590 = vunpack.c.l.b16 %v494
        %v591 = vunpack.c.l.b16 %v495
        %v592 = vunpack.c.l.b16 %v496
        %v593 = vunpack.c.l.b16 %v497
        %v594 = vunpack.c.l.b16 %v498
        %v595 = vunpack.c.l.b16 %v499
        %v596 = vunpack.c.l.b16 %v500
        %v597 = vunpack.c.l.b16 %v501
        %v598 = vunpack.c.l.b16 %v502
        %v599 = vunpack.c.l.b16 %v503
        %v600 = vunpack.c.l.b16 %v504
        %v601 = vunpack.c.l.b16 %v505
        %v602 = vunpack.c.l.b16 %v506
        %v603 = vunpack.c.l.b16 %v507
        %v604 = vunpack.c.l.b16 %v508
        %v605 = vunpack.c.l.b16 %v509
        %v606 = vunpack.c.l.b16 %v510
        %v607 = vunpack.c.l.b16 %v511
        %v608 = vunpack.c.l.b16 %v512
        %v609 = vunpack.c.l.b16 %v513
        %v610 = vunpack.c.l.b16 %v514
        %v611 = vunpack.c.l.b16 %v515
        %v612 = vunpack.c.l.b16 %v516
        %v613 = vunpack.c.l.b16 %v517
        %v614 = vunpack.c.l.b16 %v518
        %v615 = vunpack.c.l.b16 %v519
        %v616 = vunpack.c.l.b16 %v520
        %v617 = vunpack.c.l.b16 %v521
        %v618 = vunpack.c.l.b16 %v522
        %v619 = vpack.c.b16 %v572, %v571
        %v620 = vpack.c.b16 %v574, %v573
        %v621 = vpack.c.b16 %v576, %v575
        %v622 = vpack.c.b16 %v578, %v577
        %v623 = vpack.c.b16 %v580, %v579
        %v624 = vpack.c.b16 %v582, %v581
        %v625 = vpack.c.b16 %v584, %v583
        %v626 = vpack.c.b16 %v586, %v585
        %v627 = vpack.c.b16 %v588, %v587
        %v628 = vpack.c.b16 %v590, %v589
        %v629 = vpack.c.b16 %v592, %v591
        %v630 = vpack.c.b16 %v594, %v593
        %v631 = vpack.c.b16 %v596, %v595
        %v632 = vpack.c.b16 %v598, %v597
        %v633 = vpack.c.b16 %v600, %v599
        %v634 = vpack.c.b16 %v602, %v601
        %v635 = vpack.c.b16 %v604, %v603
        %v636 = vpack.c.b16 %v606, %v605
        %v637 = vpack.c.b16 %v608, %v607
        %v638 = vpack.c.b16 %v610, %v609
        %v639 = vpack.c.b16 %v612, %v611
        %v640 = vpack.c.b16 %v614, %v613
        %v641 = vpack.c.b16 %v616, %v615
        %v642 = vpack.c.b16 %v618, %v617
        %667 = vmatprep.subr.bf16.mxu0 0
        %668 = vmatpush1.bf16.msra.mxu0 %v619
        %669 = vmatprep.subr.bf16.mxu0 0
        %670 = vmatpush1.bf16.msra.mxu0 %v620
        %671 = vmatprep.subr.bf16.mxu0 0
        %672 = vmatpush1.bf16.msra.mxu0 %v621
        %673 = vmatprep.subr.bf16.mxu0 0
        %674 = vmatpush1.bf16.msra.mxu0 %v622
        %675 = vmatprep.subr.bf16.mxu0 0
        %676 = vmatpush1.bf16.msra.mxu0 %v623
        %677 = vmatprep.subr.bf16.mxu0 0
        %678 = vmatpush1.bf16.msra.mxu0 %v624
        %679 = vmatprep.subr.bf16.mxu0 0
        %680 = vmatpush1.bf16.msra.mxu0 %v625
        %681 = vmatprep.subr.bf16.mxu0 0
        %682 = vmatpush1.bf16.msra.mxu0 %v626
        %683 = vmatprep.subr.bf16.mxu0 0
        %684 = vmatpush1.bf16.msra.mxu0 %v627
        %685 = vmatprep.subr.bf16.mxu0 0
        %686 = vmatpush1.bf16.msra.mxu0 %v628
        %687 = vmatprep.subr.bf16.mxu0 0
        %688 = vmatpush1.bf16.msra.mxu0 %v629
        %689 = vmatprep.subr.bf16.mxu0 0
        %690 = vmatpush1.bf16.msra.mxu0 %v630
        %691 = vmatprep.subr.bf16.mxu0 0
        %692 = vmatpush1.bf16.msra.mxu0 %v631
        %693 = vmatprep.subr.bf16.mxu0 0
        %694 = vmatpush1.bf16.msra.mxu0 %v632
        %695 = vmatprep.subr.bf16.mxu0 0
        %696 = vmatpush1.bf16.msra.mxu0 %v633
        %697 = vmatprep.subr.bf16.mxu0 0
        %698 = vmatpush1.bf16.msra.mxu0 %v634
        %699 = vmatprep.mubr.bf16.mxu0 %v201
        %700 = vmatmul.mubr.bf16.gmra.mrb[0].mxu0 %v200
        %v701 = vpop.f32.mrb[0].mxu0
        %v702 = vadd.f32 0.0, %v701
        %v703 = vpop.f32.mrb[0].mxu0
        %v704 = vpop.f32.mrb[0].mxu0
        %v705 = vpop.f32.mrb[0].mxu0
        %706 = vdwg.mxu0
        %707 = vmatprep.subr.bf16.mxu0 0
        %708 = vmatpush1.bf16.msra.mxu0 %v635
        %709 = vmatprep.subr.bf16.mxu0 0
        %710 = vmatpush1.bf16.msra.mxu0 %v636
        %711 = vmatprep.subr.bf16.mxu0 0
        %712 = vmatpush1.bf16.msra.mxu0 %v637
        %713 = vmatprep.subr.bf16.mxu0 0
        %714 = vmatpush1.bf16.msra.mxu0 %v638
        %715 = vmatprep.subr.bf16.mxu0 0
        %716 = vmatpush1.bf16.msra.mxu0 %v639
        %717 = vmatprep.subr.bf16.mxu0 0
        %718 = vmatpush1.bf16.msra.mxu0 %v640
        %719 = vmatprep.subr.bf16.mxu0 0
        %720 = vmatpush1.bf16.msra.mxu0 %v641
        %721 = vmatprep.subr.bf16.mxu0 0
        %722 = vmatpush1.bf16.msra.mxu0 %v642
        %723 = vmatprep.subr.bf16.mxu0 0
        %724 = vmatpush1.bf16.msra.mxu0 0
        %725 = vmatprep.subr.bf16.mxu0 0
        %726 = vmatpush1.bf16.msra.mxu0 0
        %727 = vmatprep.subr.bf16.mxu0 0
        %728 = vmatpush1.bf16.msra.mxu0 0
        %729 = vmatprep.subr.bf16.mxu0 0
        %730 = vmatpush1.bf16.msra.mxu0 0
        %731 = vmatprep.subr.bf16.mxu0 0
        %732 = vmatpush1.bf16.msra.mxu0 0
        %733 = vmatprep.subr.bf16.mxu0 0
        %734 = vmatpush1.bf16.msra.mxu0 0
        %735 = vmatprep.subr.bf16.mxu0 0
        %736 = vmatpush1.bf16.msra.mxu0 0
        %737 = vmatprep.subr.bf16.mxu0 0
        %738 = vmatpush1.bf16.msra.mxu0 0
        %739 = vmatprep.mubr.bf16.mxu0 0
        %740 = vmatmul.mubr.bf16.gmra.mrb[0].mxu0 %v202
        %v741 = vpop.f32.mrb[0].mxu0
        %v742 = vadd.f32 %v702, %v741
        %v743 = vpop.f32.mrb[0].mxu0
        %v744 = vpop.f32.mrb[0].mxu0
        %v745 = vpop.f32.mrb[0].mxu0
        %746 = vdwg.mxu0
        %v747 = vld [vmem:[%s3] sm:$0xf]
        %v748 = vld [vmem:[%s3 + $0x4] sm:$0xf]
        %v749 = vld [vmem:[%s3 + $0x8] sm:$0xf]
        %v750 = vld [vmem:[%s3 + $0xc] sm:$0xf]
        %v751 = vld [vmem:[%s3 + $0x10] sm:$0xf]
        %v752 = vld [vmem:[%s3 + $0x14] sm:$0xf]
        %v753 = vld [vmem:[%s3 + $0x18] sm:$0xf]
        %v754 = vld [vmem:[%s3 + $0x1c] sm:$0xf]
        %v755 = vld [vmem:[%s3 + $0x20] sm:$0xf]
        %v756 = vld [vmem:[%s3 + $0x24] sm:$0xf]
        %v757 = vld [vmem:[%s3 + $0x28] sm:$0xf]
        %v758 = vld [vmem:[%s3 + $0x2c] sm:$0xf]
        %v759 = vld [vmem:[%s3 + $0x30] sm:$0xf]
        %v760 = vld [vmem:[%s3 + $0x34] sm:$0xf]
        %v761 = vld [vmem:[%s3 + $0x38] sm:$0xf]
        %v762 = vld [vmem:[%s3 + $0x3c] sm:$0xf]
        %v763 = vld [vmem:[%s3 + $0x40] sm:$0xf]
        %v764 = vld [vmem:[%s3 + $0x44] sm:$0xf]
        %v765 = vld [vmem:[%s3 + $0x48] sm:$0xf]
        %v766 = vld [vmem:[%s3 + $0x4c] sm:$0xf]
        %v767 = vld [vmem:[%s3 + $0x50] sm:$0xf]
        %v768 = vld [vmem:[%s3 + $0x54] sm:$0xf]
        %v769 = vld [vmem:[%s3 + $0x58] sm:$0xf]
        %v770 = vld [vmem:[%s3 + $0x5c] sm:$0xf]
        %v771 = vld [vmem:[%s3 + $0x60] sm:$0xf]
        %v772 = vld [vmem:[%s3 + $0x64] sm:$0xf]
        %v773 = vld [vmem:[%s3 + $0x68] sm:$0xf]
        %v774 = vld [vmem:[%s3 + $0x6c] sm:$0xf]
        %v775 = vld [vmem:[%s3 + $0x70] sm:$0xf]
        %v776 = vld [vmem:[%s3 + $0x74] sm:$0xf]
        %v777 = vld [vmem:[%s3 + $0x78] sm:$0xf]
        %v778 = vld [vmem:[%s3 + $0x7c] sm:$0xf]
        %v779 = vld [vmem:[%s3 + $0x80] sm:$0xf]
        %v780 = vld [vmem:[%s3 + $0x84] sm:$0xf]
        %v781 = vld [vmem:[%s3 + $0x88] sm:$0xf]
        %v782 = vld [vmem:[%s3 + $0x8c] sm:$0xf]
        %v783 = vld [vmem:[%s3 + $0x90] sm:$0xf]
        %v784 = vld [vmem:[%s3 + $0x94] sm:$0xf]
        %v785 = vld [vmem:[%s3 + $0x98] sm:$0xf]
        %v786 = vld [vmem:[%s3 + $0x9c] sm:$0xf]
        %v787 = vld [vmem:[%s3 + $0xa0] sm:$0xf]
        %v788 = vld [vmem:[%s3 + $0xa4] sm:$0xf]
        %v789 = vld [vmem:[%s3 + $0xa8] sm:$0xf]
        %v790 = vld [vmem:[%s3 + $0xac] sm:$0xf]
        %v791 = vld [vmem:[%s3 + $0xb0] sm:$0xf]
        %v792 = vld [vmem:[%s3 + $0xb4] sm:$0xf]
        %v793 = vld [vmem:[%s3 + $0xb8] sm:$0xf]
        %v794 = vld [vmem:[%s3 + $0xbc] sm:$0xf]
        %v843 = vunpack.c.l.b16 %v747
        %v844 = vunpack.c.l.b16 %v748
        %v845 = vunpack.c.l.b16 %v749
        %v846 = vunpack.c.l.b16 %v750
        %v847 = vunpack.c.l.b16 %v751
        %v848 = vunpack.c.l.b16 %v752
        %v849 = vunpack.c.l.b16 %v753
        %v850 = vunpack.c.l.b16 %v754
        %v851 = vunpack.c.l.b16 %v755
        %v852 = vunpack.c.l.b16 %v756
        %v853 = vunpack.c.l.b16 %v757
        %v854 = vunpack.c.l.b16 %v758
        %v855 = vunpack.c.l.b16 %v759
        %v856 = vunpack.c.l.b16 %v760
        %v857 = vunpack.c.l.b16 %v761
        %v858 = vunpack.c.l.b16 %v762
        %v859 = vunpack.c.l.b16 %v763
        %v860 = vunpack.c.l.b16 %v764
        %v861 = vunpack.c.l.b16 %v765
        %v862 = vunpack.c.l.b16 %v766
        %v863 = vunpack.c.l.b16 %v767
        %v864 = vunpack.c.l.b16 %v768
        %v865 = vunpack.c.l.b16 %v769
        %v866 = vunpack.c.l.b16 %v770
        %v867 = vunpack.c.l.b16 %v771
        %v868 = vunpack.c.l.b16 %v772
        %v869 = vunpack.c.l.b16 %v773
        %v870 = vunpack.c.l.b16 %v774
        %v871 = vunpack.c.l.b16 %v775
        %v872 = vunpack.c.l.b16 %v776
        %v873 = vunpack.c.l.b16 %v777
        %v874 = vunpack.c.l.b16 %v778
        %v875 = vunpack.c.l.b16 %v779
        %v876 = vunpack.c.l.b16 %v780
        %v877 = vunpack.c.l.b16 %v781
        %v878 = vunpack.c.l.b16 %v782
        %v879 = vunpack.c.l.b16 %v783
        %v880 = vunpack.c.l.b16 %v784
        %v881 = vunpack.c.l.b16 %v785
        %v882 = vunpack.c.l.b16 %v786
        %v883 = vunpack.c.l.b16 %v787
        %v884 = vunpack.c.l.b16 %v788
        %v885 = vunpack.c.l.b16 %v789
        %v886 = vunpack.c.l.b16 %v790
        %v887 = vunpack.c.l.b16 %v791
        %v888 = vunpack.c.l.b16 %v792
        %v889 = vunpack.c.l.b16 %v793
        %v890 = vunpack.c.l.b16 %v794
        %v891 = vpack.c.b16 %v844, %v843
        %v892 = vpack.c.b16 %v846, %v845
        %v893 = vpack.c.b16 %v848, %v847
        %v894 = vpack.c.b16 %v850, %v849
        %v895 = vpack.c.b16 %v852, %v851
        %v896 = vpack.c.b16 %v854, %v853
        %v897 = vpack.c.b16 %v856, %v855
        %v898 = vpack.c.b16 %v858, %v857
        %v899 = vpack.c.b16 %v860, %v859
        %v900 = vpack.c.b16 %v862, %v861
        %v901 = vpack.c.b16 %v864, %v863
        %v902 = vpack.c.b16 %v866, %v865
        %v903 = vpack.c.b16 %v868, %v867
        %v904 = vpack.c.b16 %v870, %v869
        %v905 = vpack.c.b16 %v872, %v871
        %v906 = vpack.c.b16 %v874, %v873
        %v907 = vpack.c.b16 %v876, %v875
        %v908 = vpack.c.b16 %v878, %v877
        %v909 = vpack.c.b16 %v880, %v879
        %v910 = vpack.c.b16 %v882, %v881
        %v911 = vpack.c.b16 %v884, %v883
        %v912 = vpack.c.b16 %v886, %v885
        %v913 = vpack.c.b16 %v888, %v887
        %v914 = vpack.c.b16 %v890, %v889
        %939 = vmatprep.subr.bf16.mxu0 0
        %940 = vmatpush1.bf16.msra.mxu0 %v891
        %941 = vmatprep.subr.bf16.mxu0 0
        %942 = vmatpush1.bf16.msra.mxu0 %v892
        %943 = vmatprep.subr.bf16.mxu0 0
        %944 = vmatpush1.bf16.msra.mxu0 %v893
        %945 = vmatprep.subr.bf16.mxu0 0
        %946 = vmatpush1.bf16.msra.mxu0 %v894
        %947 = vmatprep.subr.bf16.mxu0 0
        %948 = vmatpush1.bf16.msra.mxu0 %v895
        %949 = vmatprep.subr.bf16.mxu0 0
        %950 = vmatpush1.bf16.msra.mxu0 %v896
        %951 = vmatprep.subr.bf16.mxu0 0
        %952 = vmatpush1.bf16.msra.mxu0 %v897
        %953 = vmatprep.subr.bf16.mxu0 0
        %954 = vmatpush1.bf16.msra.mxu0 %v898
        %955 = vmatprep.subr.bf16.mxu0 0
        %956 = vmatpush1.bf16.msra.mxu0 %v899
        %957 = vmatprep.subr.bf16.mxu0 0
        %958 = vmatpush1.bf16.msra.mxu0 %v900
        %959 = vmatprep.subr.bf16.mxu0 0
        %960 = vmatpush1.bf16.msra.mxu0 %v901
        %961 = vmatprep.subr.bf16.mxu0 0
        %962 = vmatpush1.bf16.msra.mxu0 %v902
        %963 = vmatprep.subr.bf16.mxu0 0
        %964 = vmatpush1.bf16.msra.mxu0 %v903
        %965 = vmatprep.subr.bf16.mxu0 0
        %966 = vmatpush1.bf16.msra.mxu0 %v904
        %967 = vmatprep.subr.bf16.mxu0 0
        %968 = vmatpush1.bf16.msra.mxu0 %v905
        %969 = vmatprep.subr.bf16.mxu0 0
        %970 = vmatpush1.bf16.msra.mxu0 %v906
        %971 = vmatprep.mubr.bf16.mxu0 %v201
        %972 = vmatmul.mubr.bf16.gmra.mrb[0].mxu0 %v200
        %v973 = vpop.f32.mrb[0].mxu0
        %v974 = vadd.f32 0.0, %v973
        %v975 = vpop.f32.mrb[0].mxu0
        %v976 = vpop.f32.mrb[0].mxu0
        %v977 = vpop.f32.mrb[0].mxu0
        %978 = vdwg.mxu0
        %979 = vmatprep.subr.bf16.mxu0 0
        %980 = vmatpush1.bf16.msra.mxu0 %v907
        %981 = vmatprep.subr.bf16.mxu0 0
        %982 = vmatpush1.bf16.msra.mxu0 %v908
        %983 = vmatprep.subr.bf16.mxu0 0
        %984 = vmatpush1.bf16.msra.mxu0 %v909
        %985 = vmatprep.subr.bf16.mxu0 0
        %986 = vmatpush1.bf16.msra.mxu0 %v910
        %987 = vmatprep.subr.bf16.mxu0 0
        %988 = vmatpush1.bf16.msra.mxu0 %v911
        %989 = vmatprep.subr.bf16.mxu0 0
        %990 = vmatpush1.bf16.msra.mxu0 %v912
        %991 = vmatprep.subr.bf16.mxu0 0
        %992 = vmatpush1.bf16.msra.mxu0 %v913
        %993 = vmatprep.subr.bf16.mxu0 0
        %994 = vmatpush1.bf16.msra.mxu0 %v914
        %995 = vmatprep.subr.bf16.mxu0 0
        %996 = vmatpush1.bf16.msra.mxu0 0
        %997 = vmatprep.subr.bf16.mxu0 0
        %998 = vmatpush1.bf16.msra.mxu0 0
        %999 = vmatprep.subr.bf16.mxu0 0
        %1000 = vmatpush1.bf16.msra.mxu0 0
        %1001 = vmatprep.subr.bf16.mxu0 0
        %1002 = vmatpush1.bf16.msra.mxu0 0
        %1003 = vmatprep.subr.bf16.mxu0 0
        %1004 = vmatpush1.bf16.msra.mxu0 0
        %1005 = vmatprep.subr.bf16.mxu0 0
        %1006 = vmatpush1.bf16.msra.mxu0 0
        %1007 = vmatprep.subr.bf16.mxu0 0
        %1008 = vmatpush1.bf16.msra.mxu0 0
        %1009 = vmatprep.subr.bf16.mxu0 0
        %1010 = vmatpush1.bf16.msra.mxu0 0
        %1011 = vmatprep.mubr.bf16.mxu0 0
        %1012 = vmatmul.mubr.bf16.gmra.mrb[0].mxu0 %v202
        %v1013 = vpop.f32.mrb[0].mxu0
        %v1014 = vadd.f32 %v974, %v1013
        %v1015 = vpop.f32.mrb[0].mxu0
        %v1016 = vpop.f32.mrb[0].mxu0
        %v1017 = vpop.f32.mrb[0].mxu0
        %1018 = vdwg.mxu0
        %v1019 = vpack.c.bf16 %v470, %v470
        %v1020 = vpack.c.bf16 %v742, %v742
        %vm1021 = vcmask 523264
        %v1023 = vsel %vm1021, %v1019, 0
        %v1026 = vsel %vm1021, %v1020, 0
        %1028 = vmatprep.subr.bf16.mxu0 0
        %1029 = vmatpush1.bf16.xpose.msra.mxu0 %v1026
        %1030 = vmatprep.subr.bf16.mxu0 0
        %1031 = vmatpush1.bf16.xpose.msra.mxu0 0
        %1032 = vmatprep.subr.bf16.mxu0 0
        %1033 = vmatpush1.bf16.xpose.msra.mxu0 0
        %1034 = vmatprep.subr.bf16.mxu0 0
        %1035 = vmatpush1.bf16.xpose.msra.mxu0 0
        %1036 = vmatprep.subr.bf16.mxu0 0
        %1037 = vmatpush1.bf16.xpose.msra.mxu0 0
        %1038 = vmatprep.subr.bf16.mxu0 0
        %1039 = vmatpush1.bf16.xpose.msra.mxu0 0
        %1040 = vmatprep.subr.bf16.mxu0 0
        %1041 = vmatpush1.bf16.xpose.msra.mxu0 0
        %1042 = vmatprep.subr.bf16.mxu0 0
        %1043 = vmatpush1.bf16.xpose.msra.mxu0 0
        %1044 = vmatprep.subr.bf16.mxu0 0
        %1045 = vmatpush1.bf16.xpose.msra.mxu0 0
        %1046 = vmatprep.subr.bf16.mxu0 0
        %1047 = vmatpush1.bf16.xpose.msra.mxu0 0
        %1048 = vmatprep.subr.bf16.mxu0 0
        %1049 = vmatpush1.bf16.xpose.msra.mxu0 0
        %1050 = vmatprep.subr.bf16.mxu0 0
        %1051 = vmatpush1.bf16.xpose.msra.mxu0 0
        %1052 = vmatprep.subr.bf16.mxu0 0
        %1053 = vmatpush1.bf16.xpose.msra.mxu0 0
        %1054 = vmatprep.subr.bf16.mxu0 0
        %1055 = vmatpush1.bf16.xpose.msra.mxu0 0
        %1056 = vmatprep.subr.bf16.mxu0 0
        %1057 = vmatpush1.bf16.xpose.msra.mxu0 0
        %1058 = vmatprep.subr.bf16.mxu0 0
        %1059 = vmatpush1.bf16.xpose.msra.mxu0 0
        %1060 = vmatprep.mubr.bf16.mxu0 0
        %1061 = vmatmul.mubr.bf16.gmra.mrb[0].mxu0 %v1023
        %v1062 = vpop.f32.mrb[0].mxu0
        %v1063 = vadd.f32 0.0, %v1062
        %v1064 = vpop.f32.mrb[0].mxu0
        %v1065 = vpop.f32.mrb[0].mxu0
        %v1066 = vpop.f32.mrb[0].mxu0
        %1067 = vdwg.mxu0
        %v1068 = vlaneseq
        %v1069 = vshrl.u32 %v1068, 7
        %v1070 = vlaneseq
        %v1071 = vand.u32 %v1070, 127
        %vm1072 = vcmp.le.s32.totalorder %v1071, %v1069
        %v1073 = vsel %vm1072, %v1063, -inf
        %vm1074 = vcmask 64512
        %v1075 = vsel %vm1074, %v1073, -inf
        %1076 = vmax.xlane.f32.xlu0 %v1075
        %v1077 = vpop.xlane.xlu0 %1076
        %v1078 = vsub.f32 %v1073, %v1077
        %v1079 = vmul.f32 %v1078, 1.442695
        %v1080 = vpow.pop %v1079
        %v1081 = vsel %vm1074, %v1080, 0.0
        %1082 = vadd.xlane.f32.xlu0 %v1081
        %v1083 = vpop.xlane.xlu0 %1082
        %v1084 = vpack.c.bf16 %v1080, %v1080
        %v1085 = vpack.c.bf16 %v1014, %v1014
        %v1087 = vsel %vm1074, %v1084, 0
        %vm1089 = vcmask 1043456
        %v1091 = vsel %vm1089, %v1085, 0
        %1093 = vmatprep.subr.bf16.mxu0 0
        %1094 = vmatpush1.bf16.msra.mxu0 %v1091
        %1095 = vmatprep.subr.bf16.mxu0 0
        %1096 = vmatpush1.bf16.msra.mxu0 0
        %1097 = vmatprep.subr.bf16.mxu0 0
        %1098 = vmatpush1.bf16.msra.mxu0 0
        %1099 = vmatprep.subr.bf16.mxu0 0
        %1100 = vmatpush1.bf16.msra.mxu0 0
        %1101 = vmatprep.subr.bf16.mxu0 0
        %1102 = vmatpush1.bf16.msra.mxu0 0
        %1103 = vmatprep.subr.bf16.mxu0 0
        %1104 = vmatpush1.bf16.msra.mxu0 0
        %1105 = vmatprep.subr.bf16.mxu0 0
        %1106 = vmatpush1.bf16.msra.mxu0 0
        %1107 = vmatprep.subr.bf16.mxu0 0
        %1108 = vmatpush1.bf16.msra.mxu0 0
        %1109 = vmatprep.subr.bf16.mxu0 0
        %1110 = vmatpush1.bf16.msra.mxu0 0
        %1111 = vmatprep.subr.bf16.mxu0 0
        %1112 = vmatpush1.bf16.msra.mxu0 0
        %1113 = vmatprep.subr.bf16.mxu0 0
        %1114 = vmatpush1.bf16.msra.mxu0 0
        %1115 = vmatprep.subr.bf16.mxu0 0
        %1116 = vmatpush1.bf16.msra.mxu0 0
        %1117 = vmatprep.subr.bf16.mxu0 0
        %1118 = vmatpush1.bf16.msra.mxu0 0
        %1119 = vmatprep.subr.bf16.mxu0 0
        %1120 = vmatpush1.bf16.msra.mxu0 0
        %1121 = vmatprep.subr.bf16.mxu0 0
        %1122 = vmatpush1.bf16.msra.mxu0 0
        %1123 = vmatprep.subr.bf16.mxu0 0
        %1124 = vmatpush1.bf16.msra.mxu0 0
        %1125 = vmatprep.mubr.bf16.mxu0 0
        %1126 = vmatmul.mubr.bf16.gmra.mrb[0].mxu0 %v1087
        %v1127 = vpop.f32.mrb[0].mxu0
        %v1128 = vadd.f32 0.0, %v1127
        %v1129 = vpop.f32.mrb[0].mxu0
        %v1130 = vpop.f32.mrb[0].mxu0
        %v1131 = vpop.f32.mrb[0].mxu0
        %1132 = vdwg.mxu0
        %v1133 = vrcp.pop %v1083
        %v1134 = vmul.f32 %v1128, %v1133
        %1135 = vst.msk [vmem:[%s190] sm:$0xff] %vm1021, %v1134
        %s1136 = sand.u32 %s115, 1
        %s1137 = scalar_lea.sflag [#allocation3], %s1136
        %s1138 = sand.u32 %s115, 1
        %s1139 = smul.addr %s1138, 8
        %s1140 = scalar_lea.vmem [#allocation2], %s1139
        // Predicated region
        $region37: #{tpu_custom_call.1} parent=35 // pred_check
          %p1141 = pneg %p125
        $region38: #{tpu_custom_call.1} parent=35 // pred_check_branch
          %1143 = sbr.rel (%p1141) target = $region40
        $region39: #{tpu_custom_call.1} parent=35 // pred_region
          %s1145 = ssub.s32 128, 128
          %1146 = vsyncadd %s1137, %s1145
          %s1147 = smul.addr %s18, 128
          %s1148 = scalar_lea.hbm %s4, %s1147
          %s1150 = sshll.u32 %s1140, 4
          %s1151 = int_to_ptr.vmem [resolvable:$true] %s1150
          %1153 = dma.vmem_to_hbm [thread:$0]  %s1151, 128, %s1148, %s1137
        $region40: #{tpu_custom_call.1} parent=35 // pred_fallthru
          _
      $region36: #{tpu_custom_call.1} parent=5 // pred_fallthru
        _
      %p1154 = scmp.le.s32.totalorder 2, %s13
      // Predicated region
      $region41: #{tpu_custom_call.1} parent=5 // pred_check
        %p1155 = pneg %p1154
      $region42: #{tpu_custom_call.1} parent=5 // pred_check_branch
        %1157 = sbr.rel (%p1155) target = $region44
      $region43: #{tpu_custom_call.1} parent=5 // pred_region
        %s1158 = ssub.s32 %s13, 2
        // Predicated region
        $region45: #{tpu_custom_call.1} parent=43 // pred_check
          %p1159 = pneg %p131
        $region46: #{tpu_custom_call.1} parent=43 // pred_check_branch
          %1161 = sbr.rel (%p1159) target = $region48
        $region47: #{tpu_custom_call.1} parent=43 // pred_region
          %s1162 = sand.u32 %s116, 1
          %s1163 = scalar_lea.sflag [#allocation3], %s1162
          %s1164 = sand.u32 %s116, 1
          %s1165 = smul.addr %s1164, 8
          %s1166 = scalar_lea.vmem [#allocation2], %s1165
          %1167 = dma.done %s1163, 128
        $region48: #{tpu_custom_call.1} parent=43 // pred_fallthru
          _
      $region44: #{tpu_custom_call.1} parent=5 // pred_fallthru
        _
    $region6: #{tpu_custom_call.1} parent=1 // loop_footer
      %s17 = sadd.s32 1, %s13
    $region7: #{tpu_custom_call.1} parent=1 // loop_footer_branch
      %12 = sbr.rel target = $region3
    $region8: #{tpu_custom_call.1} parent=1 // loop_exit
      _
    %1168 = vsyncpa [#allocation3], 1
    %s1169 = scalar_lea.sflag [#allocation3], 1
    %1170 = vsyncpa %s1169, 1

</llo_original>
